<compile_context>
chip_gen: v5e
topology: v5e:2x2
jax: 0.10.0
libtpu: 0.0.40
codegen_flags: <defaults>
</compile_context>

<pallas_src>
import functools

import jax
import jax.numpy as jnp
from jax.experimental import pallas as pl
from jax.experimental.pallas import tpu as pltpu


# ------------------------------- Pallas kernel -------------------------------
def gauss_net_kernel(x_ref, *args, num_layers):
    """Whole GaussConvNet on one (TN, W*C) row tile.

    x_ref : (TN, W*Cin0)  lane-dense activation tile
    args  : num_layers groups of 6 weight refs
            (A1 (W*Cin, W*Cout), b1 (1, W*Cout),
             A2 (W*Cout, W*Cout), b2 (1, W*Cout),
             Ad (W*Cin, W*Cout), bd (1, W*Cout))
            followed by the output ref o_ref (TN, W*Cout_last).
    """
    o_ref = args[-1]
    wrefs = args[:-1]

    h = x_ref[...]                                       # (TN, W*Cin0), f32
    for l in range(num_layers):                          # static unroll
        A1, b1, A2, b2, Ad, bd = wrefs[6 * l:6 * l + 6]
        # causal dilated conv1 (taps + chomp folded into A1) -> tanh
        z1 = jnp.tanh(jnp.dot(h, A1[...],
                              preferred_element_type=jnp.float32) + b1[...])
        # causal dilated conv2 -> tanh
        z2 = jnp.tanh(jnp.dot(z1, A2[...],
                              preferred_element_type=jnp.float32) + b2[...])
        # residual 1x1 downsample, add, relu
        res = jnp.dot(h, Ad[...],
                      preferred_element_type=jnp.float32) + bd[...]
        h = jnp.maximum(z2 + res, 0.0)
    o_ref[...] = h


# --------------------- host-side operator fusion (per layer) -----------------
def conv_matrix(Wt, W, d):
    """Fold a causal dilated (1,k) conv (conv + chomp) into (W*Cin, W*Cout).

    Tap j of the PyTorch conv multiplies x[w - (k-1-j)*d] (zero if negative),
    i.e. A[w_in*Cin + c, w_out*Cout + o] = sum_j Wt[j,c,o] * [w_out = w_in + s_j].
    """
    k, cin, cout = Wt.shape
    A = jnp.zeros((W, cin, W, cout), jnp.float32)
    for j in range(k):
        s = (k - 1 - j) * d
        A = A + jnp.einsum("wx,co->wcxo",
                           jnp.eye(W, k=s, dtype=jnp.float32), Wt[j])
    return A.reshape(W * cin, W * cout)


def pointwise_matrix(Wd, W):
    """1x1 conv as a block-diagonal (W*Cin, W*Cout) matrix."""
    cin, cout = Wd.shape
    A = jnp.einsum("wx,co->wcxo", jnp.eye(W, dtype=jnp.float32), Wd)
    return A.reshape(W * cin, W * cout)


def fuse_params(params, W, kernel_size):
    """Pre-compute (once, host side) the fused per-layer operators."""
    del kernel_size  # implied by params["W1"].shape[0]
    fused = []
    for i, P in enumerate(params):
        d = 2 ** i
        fused.append((
            conv_matrix(P["W1"], W, d), jnp.tile(P["b1"], (1, W)),
            conv_matrix(P["W2"], W, d), jnp.tile(P["b2"], (1, W)),
            pointwise_matrix(P["Wd"], W), jnp.tile(P["bd"], (1, W)),
        ))
    return fused


# ----------------------------------- wrapper ----------------------------------
def _choose_tile(n, target=256):
    """Largest multiple-of-8 divisor of n that is <= target (else full n)."""
    if n <= target:
        return n
    t = (target // 8) * 8
    while t >= 8:
        if n % t == 0:
            return t
        t -= 8
    return n


def gauss_conv_net(x_nchw, fused_params):
    """Whole GaussConvNet: NCHW in, NCHW out.  One pallas_call for all layers."""
    B, C, H, W = x_nchw.shape
    N = B * H
    cout_last = fused_params[-1][0].shape[1] // W

    # lane-dense activation layout: (N, W*C), channels minor
    x = jnp.transpose(x_nchw, (0, 2, 3, 1)).reshape(N, W * C)

    flat_ws = [a for layer in fused_params for a in layer]

    TN = _choose_tile(N)
    grid = (N // TN,)

    in_specs = [pl.BlockSpec((TN, W * C), lambda i: (i, 0))]
    in_specs += [pl.BlockSpec(a.shape, lambda i: (0, 0)) for a in flat_ws]

    out = pl.pallas_call(
        functools.partial(gauss_net_kernel, num_layers=len(fused_params)),
        out_shape=jax.ShapeDtypeStruct((N, W * cout_last), jnp.float32),
        grid=grid,
        in_specs=in_specs,
        out_specs=pl.BlockSpec((TN, W * cout_last), lambda i: (i, 0)),
        compiler_params=pltpu.CompilerParams(
            dimension_semantics=("parallel",)),
    )(x, *flat_ws)

    return jnp.transpose(out.reshape(B, H, W, cout_last), (0, 3, 1, 2))


# -------------------------- parameter construction ---------------------------
def init_params(key, num_inputs, num_channels, kernel_size):
    """Deterministic synthetic parameters (conv weights ~ N(0, 0.01), as in
    init_weights()); weight_norm folded into the effective weight."""
    params = []
    cin = num_inputs
    for cout in num_channels:
        key, k0, k1, k2, k3, k4, k5 = jax.random.split(key, 7)
        params.append(dict(
            W1=0.01 * jax.random.normal(k0, (kernel_size, cin, cout), jnp.float32),
            b1=0.01 * jax.random.normal(k1, (1, cout), jnp.float32),
            W2=0.01 * jax.random.normal(k2, (kernel_size, cout, cout), jnp.float32),
            b2=0.01 * jax.random.normal(k3, (1, cout), jnp.float32),
            Wd=0.01 * jax.random.normal(k4, (cin, cout), jnp.float32),
            bd=0.01 * jax.random.normal(k5, (1, cout), jnp.float32),
        ))
        cin = cout
    return params


# ------------------------------ pure-JAX reference ----------------------------
def _ref_block(x, P, d, k):
    N, W, _ = x.shape
    p = (k - 1) * d

    def cconv(inp, Wt, b):
        ip = jnp.pad(inp, ((0, 0), (p, 0), (0, 0)))
        out = jnp.zeros((N, W, Wt.shape[-1]), jnp.float32)
        for j in range(k):
            s = (k - 1 - j) * d
            out = out + jnp.einsum("nwc,co->nwo", ip[:, p - s:p - s + W, :], Wt[j])
        return out + b

    h1 = jnp.tanh(cconv(x, P["W1"], P["b1"]))
    h2 = jnp.tanh(cconv(h1, P["W2"], P["b2"]))
    res = jnp.einsum("nwc,co->nwo", x, P["Wd"]) + P["bd"]
    return jnp.maximum(h2 + res, 0.0)


def ref_net(x_nchw, params, kernel_size):
    B, C, H, W = x_nchw.shape
    x = jnp.transpose(x_nchw, (0, 2, 3, 1)).reshape(B * H, W, C)
    for i, P in enumerate(params):
        x = _ref_block(x, P, 2 ** i, kernel_size)
    return jnp.transpose(x.reshape(B, H, W, x.shape[-1]), (0, 3, 1, 2))


# ------------------------------------ main ------------------------------------
if __name__ == "__main__":
    key = jax.random.PRNGKey(0)
    kx, kp = jax.random.split(key)

    # small shapes: batch=2, channels=4, H=4, W=16 ; num_channels=[8, 8], k=2
    B, C, H, W = 2, 4, 4, 16
    num_channels = [8, 8]
    kernel_size = 2

    x = jax.random.normal(kx, (B, C, H, W), dtype=jnp.float32)
    params = init_params(kp, C, num_channels, kernel_size)
    fused = fuse_params(params, W, kernel_size)          # host-side, once

    out = jax.block_until_ready(gauss_conv_net(x, fused))
    ref = ref_net(x, params, kernel_size)

    assert out.shape == (B, num_channels[-1], H, W), out.shape
    assert jnp.allclose(out, ref, atol=1e-5, rtol=1e-5), \
        float(jnp.max(jnp.abs(out - ref)))
    print("KERNEL_OK")
</pallas_src>

<mosaic_0001>
module attributes {stable_mosaic.version = 11 : i64} {
  func.func @gauss_net_kernel(%arg0: i32, %arg1: memref<8x64xf32, #tpu.memory_space<vmem>>, %arg2: memref<64x128xf32, #tpu.memory_space<vmem>>, %arg3: memref<1x128xf32, #tpu.memory_space<vmem>>, %arg4: memref<128x128xf32, #tpu.memory_space<vmem>>, %arg5: memref<1x128xf32, #tpu.memory_space<vmem>>, %arg6: memref<64x128xf32, #tpu.memory_space<vmem>>, %arg7: memref<1x128xf32, #tpu.memory_space<vmem>>, %arg8: memref<128x128xf32, #tpu.memory_space<vmem>>, %arg9: memref<1x128xf32, #tpu.memory_space<vmem>>, %arg10: memref<128x128xf32, #tpu.memory_space<vmem>>, %arg11: memref<1x128xf32, #tpu.memory_space<vmem>>, %arg12: memref<128x128xf32, #tpu.memory_space<vmem>>, %arg13: memref<1x128xf32, #tpu.memory_space<vmem>>, %arg14: memref<8x128xf32, #tpu.memory_space<vmem>>) attributes {dimension_semantics = [#tpu.dimension_semantics<parallel>], iteration_bounds = array<i64: 1>, scalar_prefetch = 0 : i64, scratch_operands = 0 : i64, tpu.core_type = #tpu.core_type<tc>, window_params = [{transform_indices = @transform_0, window_bounds = array<i64: 8, 64>}, {pipeline_mode = #tpu.pipeline_mode<synchronous>, transform_indices = @transform_1, window_bounds = array<i64: 64, 128>}, {pipeline_mode = #tpu.pipeline_mode<synchronous>, transform_indices = @transform_2, window_bounds = array<i64: 1, 128>}, {pipeline_mode = #tpu.pipeline_mode<synchronous>, transform_indices = @transform_3, window_bounds = array<i64: 128, 128>}, {pipeline_mode = #tpu.pipeline_mode<synchronous>, transform_indices = @transform_4, window_bounds = array<i64: 1, 128>}, {pipeline_mode = #tpu.pipeline_mode<synchronous>, transform_indices = @transform_5, window_bounds = array<i64: 64, 128>}, {pipeline_mode = #tpu.pipeline_mode<synchronous>, transform_indices = @transform_6, window_bounds = array<i64: 1, 128>}, {pipeline_mode = #tpu.pipeline_mode<synchronous>, transform_indices = @transform_7, window_bounds = array<i64: 128, 128>}, {pipeline_mode = #tpu.pipeline_mode<synchronous>, transform_indices = @transform_8, window_bounds = array<i64: 1, 128>}, {pipeline_mode = #tpu.pipeline_mode<synchronous>, transform_indices = @transform_9, window_bounds = array<i64: 128, 128>}, {pipeline_mode = #tpu.pipeline_mode<synchronous>, transform_indices = @transform_10, window_bounds = array<i64: 1, 128>}, {pipeline_mode = #tpu.pipeline_mode<synchronous>, transform_indices = @transform_11, window_bounds = array<i64: 128, 128>}, {pipeline_mode = #tpu.pipeline_mode<synchronous>, transform_indices = @transform_12, window_bounds = array<i64: 1, 128>}, {transform_indices = @transform_13, window_bounds = array<i64: 8, 128>}]} {
    %c0 = arith.constant 0 : index
    %c0_0 = arith.constant 0 : index
    %0 = vector.load %arg1[%c0, %c0_0] : memref<8x64xf32, #tpu.memory_space<vmem>>, vector<8x64xf32>
    %c0_1 = arith.constant 0 : index
    %c0_2 = arith.constant 0 : index
    %1 = vector.load %arg2[%c0_1, %c0_2] : memref<64x128xf32, #tpu.memory_space<vmem>>, vector<64x128xf32>
    %cst = arith.constant dense<0.000000e+00> : vector<8x128xf32>
    %2 = tpu.matmul %0, %1, %cst {dimension_numbers = #tpu.dot_dimension_numbers<[1], [0], [0], [1], [0, 0, 1, 1], [], []>} : vector<8x64xf32>, vector<64x128xf32>, vector<8x128xf32> -> vector<8x128xf32>
    %c0_3 = arith.constant 0 : index
    %c0_4 = arith.constant 0 : index
    %3 = vector.load %arg3[%c0_3, %c0_4] : memref<1x128xf32, #tpu.memory_space<vmem>>, vector<1x128xf32>
    %4 = vector.broadcast %3 : vector<1x128xf32> to vector<8x128xf32>
    %5 = arith.addf %2, %4 : vector<8x128xf32>
    %6 = math.tanh %5 : vector<8x128xf32>
    %c0_5 = arith.constant 0 : index
    %c0_6 = arith.constant 0 : index
    %7 = vector.load %arg4[%c0_5, %c0_6] : memref<128x128xf32, #tpu.memory_space<vmem>>, vector<128x128xf32>
    %cst_7 = arith.constant dense<0.000000e+00> : vector<8x128xf32>
    %8 = tpu.matmul %6, %7, %cst_7 {dimension_numbers = #tpu.dot_dimension_numbers<[1], [0], [0], [1], [0, 0, 1, 1], [], []>} : vector<8x128xf32>, vector<128x128xf32>, vector<8x128xf32> -> vector<8x128xf32>
    %c0_8 = arith.constant 0 : index
    %c0_9 = arith.constant 0 : index
    %9 = vector.load %arg5[%c0_8, %c0_9] : memref<1x128xf32, #tpu.memory_space<vmem>>, vector<1x128xf32>
    %10 = vector.broadcast %9 : vector<1x128xf32> to vector<8x128xf32>
    %11 = arith.addf %8, %10 : vector<8x128xf32>
    %12 = math.tanh %11 : vector<8x128xf32>
    %c0_10 = arith.constant 0 : index
    %c0_11 = arith.constant 0 : index
    %13 = vector.load %arg6[%c0_10, %c0_11] : memref<64x128xf32, #tpu.memory_space<vmem>>, vector<64x128xf32>
    %cst_12 = arith.constant dense<0.000000e+00> : vector<8x128xf32>
    %14 = tpu.matmul %0, %13, %cst_12 {dimension_numbers = #tpu.dot_dimension_numbers<[1], [0], [0], [1], [0, 0, 1, 1], [], []>} : vector<8x64xf32>, vector<64x128xf32>, vector<8x128xf32> -> vector<8x128xf32>
    %c0_13 = arith.constant 0 : index
    %c0_14 = arith.constant 0 : index
    %15 = vector.load %arg7[%c0_13, %c0_14] : memref<1x128xf32, #tpu.memory_space<vmem>>, vector<1x128xf32>
    %16 = vector.broadcast %15 : vector<1x128xf32> to vector<8x128xf32>
    %17 = arith.addf %14, %16 : vector<8x128xf32>
    %18 = arith.addf %12, %17 : vector<8x128xf32>
    %cst_15 = arith.constant 0.000000e+00 : f32
    %19 = vector.broadcast %cst_15 : f32 to vector<8x128xf32>
    %20 = arith.maximumf %18, %19 : vector<8x128xf32>
    %c0_16 = arith.constant 0 : index
    %c0_17 = arith.constant 0 : index
    %21 = vector.load %arg8[%c0_16, %c0_17] : memref<128x128xf32, #tpu.memory_space<vmem>>, vector<128x128xf32>
    %cst_18 = arith.constant dense<0.000000e+00> : vector<8x128xf32>
    %22 = tpu.matmul %20, %21, %cst_18 {dimension_numbers = #tpu.dot_dimension_numbers<[1], [0], [0], [1], [0, 0, 1, 1], [], []>} : vector<8x128xf32>, vector<128x128xf32>, vector<8x128xf32> -> vector<8x128xf32>
    %c0_19 = arith.constant 0 : index
    %c0_20 = arith.constant 0 : index
    %23 = vector.load %arg9[%c0_19, %c0_20] : memref<1x128xf32, #tpu.memory_space<vmem>>, vector<1x128xf32>
    %24 = vector.broadcast %23 : vector<1x128xf32> to vector<8x128xf32>
    %25 = arith.addf %22, %24 : vector<8x128xf32>
    %26 = math.tanh %25 : vector<8x128xf32>
    %c0_21 = arith.constant 0 : index
    %c0_22 = arith.constant 0 : index
    %27 = vector.load %arg10[%c0_21, %c0_22] : memref<128x128xf32, #tpu.memory_space<vmem>>, vector<128x128xf32>
    %cst_23 = arith.constant dense<0.000000e+00> : vector<8x128xf32>
    %28 = tpu.matmul %26, %27, %cst_23 {dimension_numbers = #tpu.dot_dimension_numbers<[1], [0], [0], [1], [0, 0, 1, 1], [], []>} : vector<8x128xf32>, vector<128x128xf32>, vector<8x128xf32> -> vector<8x128xf32>
    %c0_24 = arith.constant 0 : index
    %c0_25 = arith.constant 0 : index
    %29 = vector.load %arg11[%c0_24, %c0_25] : memref<1x128xf32, #tpu.memory_space<vmem>>, vector<1x128xf32>
    %30 = vector.broadcast %29 : vector<1x128xf32> to vector<8x128xf32>
    %31 = arith.addf %28, %30 : vector<8x128xf32>
    %32 = math.tanh %31 : vector<8x128xf32>
    %c0_26 = arith.constant 0 : index
    %c0_27 = arith.constant 0 : index
    %33 = vector.load %arg12[%c0_26, %c0_27] : memref<128x128xf32, #tpu.memory_space<vmem>>, vector<128x128xf32>
    %cst_28 = arith.constant dense<0.000000e+00> : vector<8x128xf32>
    %34 = tpu.matmul %20, %33, %cst_28 {dimension_numbers = #tpu.dot_dimension_numbers<[1], [0], [0], [1], [0, 0, 1, 1], [], []>} : vector<8x128xf32>, vector<128x128xf32>, vector<8x128xf32> -> vector<8x128xf32>
    %c0_29 = arith.constant 0 : index
    %c0_30 = arith.constant 0 : index
    %35 = vector.load %arg13[%c0_29, %c0_30] : memref<1x128xf32, #tpu.memory_space<vmem>>, vector<1x128xf32>
    %36 = vector.broadcast %35 : vector<1x128xf32> to vector<8x128xf32>
    %37 = arith.addf %34, %36 : vector<8x128xf32>
    %38 = arith.addf %32, %37 : vector<8x128xf32>
    %cst_31 = arith.constant 0.000000e+00 : f32
    %39 = vector.broadcast %cst_31 : f32 to vector<8x128xf32>
    %40 = arith.maximumf %38, %39 : vector<8x128xf32>
    %c0_32 = arith.constant 0 : index
    %c0_33 = arith.constant 0 : index
    %41 = vector.load %arg14[%c0_32, %c0_33] : memref<8x128xf32, #tpu.memory_space<vmem>>, vector<8x128xf32>
    tpu.vector_store %arg14[%c0_32, %c0_33], %40 {strides = array<i32>} : memref<8x128xf32, #tpu.memory_space<vmem>>, vector<8x128xf32>,
    return
  }
  func.func @transform_0(%arg0: i32) -> (i32, i32) {
    %c0_i32 = arith.constant 0 : i32
    %c0_i32_0 = arith.constant 0 : i32
    return %arg0, %c0_i32 : i32, i32
  }
  func.func @transform_1(%arg0: i32) -> (i32, i32) {
    %c0_i32 = arith.constant 0 : i32
    %c0_i32_0 = arith.constant 0 : i32
    %c0_i32_1 = arith.constant 0 : i32
    return %c0_i32, %c0_i32_0 : i32, i32
  }
  func.func @transform_2(%arg0: i32) -> (i32, i32) {
    %c0_i32 = arith.constant 0 : i32
    %c0_i32_0 = arith.constant 0 : i32
    %c0_i32_1 = arith.constant 0 : i32
    return %c0_i32, %c0_i32_0 : i32, i32
  }
  func.func @transform_3(%arg0: i32) -> (i32, i32) {
    %c0_i32 = arith.constant 0 : i32
    %c0_i32_0 = arith.constant 0 : i32
    %c0_i32_1 = arith.constant 0 : i32
    return %c0_i32, %c0_i32_0 : i32, i32
  }
  func.func @transform_4(%arg0: i32) -> (i32, i32) {
    %c0_i32 = arith.constant 0 : i32
    %c0_i32_0 = arith.constant 0 : i32
    %c0_i32_1 = arith.constant 0 : i32
    return %c0_i32, %c0_i32_0 : i32, i32
  }
  func.func @transform_5(%arg0: i32) -> (i32, i32) {
    %c0_i32 = arith.constant 0 : i32
    %c0_i32_0 = arith.constant 0 : i32
    %c0_i32_1 = arith.constant 0 : i32
    return %c0_i32, %c0_i32_0 : i32, i32
  }
  func.func @transform_6(%arg0: i32) -> (i32, i32) {
    %c0_i32 = arith.constant 0 : i32
    %c0_i32_0 = arith.constant 0 : i32
    %c0_i32_1 = arith.constant 0 : i32
    return %c0_i32, %c0_i32_0 : i32, i32
  }
  func.func @transform_7(%arg0: i32) -> (i32, i32) {
    %c0_i32 = arith.constant 0 : i32
    %c0_i32_0 = arith.constant 0 : i32
    %c0_i32_1 = arith.constant 0 : i32
    return %c0_i32, %c0_i32_0 : i32, i32
  }
  func.func @transform_8(%arg0: i32) -> (i32, i32) {
    %c0_i32 = arith.constant 0 : i32
    %c0_i32_0 = arith.constant 0 : i32
    %c0_i32_1 = arith.constant 0 : i32
    return %c0_i32, %c0_i32_0 : i32, i32
  }
  func.func @transform_9(%arg0: i32) -> (i32, i32) {
    %c0_i32 = arith.constant 0 : i32
    %c0_i32_0 = arith.constant 0 : i32
    %c0_i32_1 = arith.constant 0 : i32
    return %c0_i32, %c0_i32_0 : i32, i32
  }
  func.func @transform_10(%arg0: i32) -> (i32, i32) {
    %c0_i32 = arith.constant 0 : i32
    %c0_i32_0 = arith.constant 0 : i32
    %c0_i32_1 = arith.constant 0 : i32
    return %c0_i32, %c0_i32_0 : i32, i32
  }
  func.func @transform_11(%arg0: i32) -> (i32, i32) {
    %c0_i32 = arith.constant 0 : i32
    %c0_i32_0 = arith.constant 0 : i32
    %c0_i32_1 = arith.constant 0 : i32
    return %c0_i32, %c0_i32_0 : i32, i32
  }
  func.func @transform_12(%arg0: i32) -> (i32, i32) {
    %c0_i32 = arith.constant 0 : i32
    %c0_i32_0 = arith.constant 0 : i32
    %c0_i32_1 = arith.constant 0 : i32
    return %c0_i32, %c0_i32_0 : i32, i32
  }
  func.func @transform_13(%arg0: i32) -> (i32, i32) {
    %c0_i32 = arith.constant 0 : i32
    %c0_i32_0 = arith.constant 0 : i32
    return %arg0, %c0_i32 : i32, i32
  }
}

</mosaic_0001>

<llo_original>
// kernel: tpu_custom_call.1
$region0: #{tpu_custom_call.1}
  #allocation0 [shape = 'u32[]', space=smem, size = 0x4, offset = 0x4, fixed_abs, tag = 'smem constant byte address 0x4 - core index']
  #allocation1 [shape = 'u32[72,128]{1,0:T(1,128)}', space=vmem, size = 0x9000, scoped, tag = 'internal scratch']
  %s0 = inlined_call_operand.hbm [shape: f32[8,64], index: 0, kind: input, shape index: {}]
  %s1 = inlined_call_operand.hbm [shape: f32[64,128], index: 1, kind: input, shape index: {}]
  %s2 = inlined_call_operand.vmem [shape: f32[1,128], index: 2, kind: input, shape index: {}]
  %s3 = inlined_call_operand.hbm [shape: f32[128,128], index: 3, kind: input, shape index: {}]
  %s4 = inlined_call_operand.vmem [shape: f32[1,128], index: 4, kind: input, shape index: {}]
  %s5 = inlined_call_operand.hbm [shape: f32[64,128], index: 5, kind: input, shape index: {}]
  %s6 = inlined_call_operand.vmem [shape: f32[1,128], index: 6, kind: input, shape index: {}]
  %s7 = inlined_call_operand.hbm [shape: f32[128,128], index: 7, kind: input, shape index: {}]
  %s8 = inlined_call_operand.vmem [shape: f32[1,128], index: 8, kind: input, shape index: {}]
  %s9 = inlined_call_operand.hbm [shape: f32[128,128], index: 9, kind: input, shape index: {}]
  %s10 = inlined_call_operand.vmem [shape: f32[1,128], index: 10, kind: input, shape index: {}]
  %s11 = inlined_call_operand.hbm [shape: f32[128,128], index: 11, kind: input, shape index: {}]
  %s12 = inlined_call_operand.vmem [shape: f32[1,128], index: 12, kind: input, shape index: {}]
  %s13 = inlined_call_operand.hbm [shape: f32[8,128], index: 13, kind: output, shape index: {}]
  %s14 = sld [smem:[#allocation0]]
  $region90: #{tpu_custom_call.1} parent=0
    _
  %s16 = ssub.s32 1, %s14
  %s17 = scalar_select 0, %s16, %s14
  $region1: #{tpu_custom_call.1} parent=0
    #allocation2 [shape = 'u8[4096]{0}', space=vmem, size = 0x1000, scoped, tag = 'input window, operand 0, single buffered']
    #allocation3 [shape = 's32[1]{0}', space=sflag, size = 0x4, scoped, tag = 'scoped memory for tpu_custom_call.1']
    #allocation4 [shape = 's32[1]{0}', space=sflag, size = 0x4, scoped, tag = 'scoped memory for tpu_custom_call.1']
    #allocation5 [shape = 'u8[32768]{0}', space=vmem, size = 0x8000, scoped, tag = 'input window, operand 1, single buffered']
    #allocation6 [shape = 's32[1]{0}', space=sflag, size = 0x4, scoped, tag = 'scoped memory for tpu_custom_call.1']
    #allocation7 [shape = 'u8[65536]{0}', space=vmem, size = 0x10000, scoped, tag = 'input window, operand 3, single buffered']
    #allocation8 [shape = 'u8[32768]{0}', space=vmem, size = 0x8000, scoped, tag = 'input window, operand 5, single buffered']
    #allocation9 [shape = 's32[1]{0}', space=sflag, size = 0x4, scoped, tag = 'scoped memory for tpu_custom_call.1']
    #allocation10 [shape = 'u8[65536]{0}', space=vmem, size = 0x10000, scoped, tag = 'input window, operand 7, single buffered']
    #allocation11 [shape = 'u8[65536]{0}', space=vmem, size = 0x10000, scoped, tag = 'input window, operand 9, single buffered']
    #allocation12 [shape = 's32[1]{0}', space=sflag, size = 0x4, scoped, tag = 'scoped memory for tpu_custom_call.1']
    #allocation13 [shape = 'u8[65536]{0}', space=vmem, size = 0x10000, scoped, tag = 'input window, operand 11, single buffered']
    #allocation14 [shape = 'u8[4096]{0}', space=vmem, size = 0x1000, scoped, tag = 'output window, operand 0, single buffered']
    %18 = vsyncpa [#allocation3], 0
    %19 = vsyncpa [#allocation6], 0
    %20 = vsyncpa [#allocation9], 0
    %21 = vsyncpa [#allocation12], 0
    %22 = vsyncpa [#allocation4], 0
    // Predicated region
    $region2: #{tpu_custom_call.1} parent=1 // pred_check
      _
    $region3: #{tpu_custom_call.1} parent=1 // pred_check_branch
      %24 = sbr.rel (0) target = $region5
    $region4: #{tpu_custom_call.1} parent=1 // pred_region
      %26 = vsyncadd [#allocation3], 0
      %s28 = sshll.u32 %s0, 4
      %s29 = int_to_ptr.hbm [resolvable:$true] %s28
      %s30 = sshll.u32 [#allocation2], 4
      %s31 = int_to_ptr.vmem [resolvable:$true] %s30
      %33 = dma.hbm_to_vmem [thread:$0]  %s29, 128, %s31, [#allocation3]
    $region5: #{tpu_custom_call.1} parent=1 // pred_fallthru
      _
    // Predicated region
    $region6: #{tpu_custom_call.1} parent=1 // pred_check
      _
    $region7: #{tpu_custom_call.1} parent=1 // pred_check_branch
      %35 = sbr.rel (0) target = $region9
    $region8: #{tpu_custom_call.1} parent=1 // pred_region
      %37 = vsyncadd [#allocation6], 0
      %s38 = sshll.u32 %s1, 4
      %s39 = int_to_ptr.hbm [resolvable:$true] %s38
      %s40 = sshll.u32 [#allocation5], 4
      %s41 = int_to_ptr.vmem [resolvable:$true] %s40
      %46 = dma.hbm_to_vmem [thread:$0]  %s39, 1024, %s41, [#allocation6], 128, 128, 8
    $region9: #{tpu_custom_call.1} parent=1 // pred_fallthru
      _
    // Predicated region
    $region10: #{tpu_custom_call.1} parent=1 // pred_check
      _
    $region11: #{tpu_custom_call.1} parent=1 // pred_check_branch
      %48 = sbr.rel (0) target = $region13
    $region12: #{tpu_custom_call.1} parent=1 // pred_region
      _
    $region13: #{tpu_custom_call.1} parent=1 // pred_fallthru
      _
    // Predicated region
    $region14: #{tpu_custom_call.1} parent=1 // pred_check
      _
    $region15: #{tpu_custom_call.1} parent=1 // pred_check_branch
      %50 = sbr.rel (0) target = $region17
    $region16: #{tpu_custom_call.1} parent=1 // pred_region
      %52 = vsyncadd [#allocation6], 0
      %s53 = sshll.u32 %s3, 4
      %s54 = int_to_ptr.hbm [resolvable:$true] %s53
      %s55 = sshll.u32 [#allocation7], 4
      %s56 = int_to_ptr.vmem [resolvable:$true] %s55
      %61 = dma.hbm_to_vmem [thread:$0]  %s54, 2048, %s56, [#allocation6], 128, 128, 8
    $region17: #{tpu_custom_call.1} parent=1 // pred_fallthru
      _
    // Predicated region
    $region18: #{tpu_custom_call.1} parent=1 // pred_check
      _
    $region19: #{tpu_custom_call.1} parent=1 // pred_check_branch
      %63 = sbr.rel (0) target = $region21
    $region20: #{tpu_custom_call.1} parent=1 // pred_region
      _
    $region21: #{tpu_custom_call.1} parent=1 // pred_fallthru
      _
    // Predicated region
    $region22: #{tpu_custom_call.1} parent=1 // pred_check
      _
    $region23: #{tpu_custom_call.1} parent=1 // pred_check_branch
      %65 = sbr.rel (0) target = $region25
    $region24: #{tpu_custom_call.1} parent=1 // pred_region
      %67 = vsyncadd [#allocation9], 0
      %s68 = sshll.u32 %s5, 4
      %s69 = int_to_ptr.hbm [resolvable:$true] %s68
      %s70 = sshll.u32 [#allocation8], 4
      %s71 = int_to_ptr.vmem [resolvable:$true] %s70
      %76 = dma.hbm_to_vmem [thread:$0]  %s69, 1024, %s71, [#allocation9], 128, 128, 8
    $region25: #{tpu_custom_call.1} parent=1 // pred_fallthru
      _
    // Predicated region
    $region26: #{tpu_custom_call.1} parent=1 // pred_check
      _
    $region27: #{tpu_custom_call.1} parent=1 // pred_check_branch
      %78 = sbr.rel (0) target = $region29
    $region28: #{tpu_custom_call.1} parent=1 // pred_region
      _
    $region29: #{tpu_custom_call.1} parent=1 // pred_fallthru
      _
    // Predicated region
    $region30: #{tpu_custom_call.1} parent=1 // pred_check
      _
    $region31: #{tpu_custom_call.1} parent=1 // pred_check_branch
      %80 = sbr.rel (0) target = $region33
    $region32: #{tpu_custom_call.1} parent=1 // pred_region
      %82 = vsyncadd [#allocation9], 0
      %s83 = sshll.u32 %s7, 4
      %s84 = int_to_ptr.hbm [resolvable:$true] %s83
      %s85 = sshll.u32 [#allocation10], 4
      %s86 = int_to_ptr.vmem [resolvable:$true] %s85
      %91 = dma.hbm_to_vmem [thread:$0]  %s84, 2048, %s86, [#allocation9], 128, 128, 8
    $region33: #{tpu_custom_call.1} parent=1 // pred_fallthru
      _
    // Predicated region
    $region34: #{tpu_custom_call.1} parent=1 // pred_check
      _
    $region35: #{tpu_custom_call.1} parent=1 // pred_check_branch
      %93 = sbr.rel (0) target = $region37
    $region36: #{tpu_custom_call.1} parent=1 // pred_region
      _
    $region37: #{tpu_custom_call.1} parent=1 // pred_fallthru
      _
    // Predicated region
    $region38: #{tpu_custom_call.1} parent=1 // pred_check
      _
    $region39: #{tpu_custom_call.1} parent=1 // pred_check_branch
      %95 = sbr.rel (0) target = $region41
    $region40: #{tpu_custom_call.1} parent=1 // pred_region
      %97 = vsyncadd [#allocation12], 0
      %s98 = sshll.u32 %s9, 4
      %s99 = int_to_ptr.hbm [resolvable:$true] %s98
      %s100 = sshll.u32 [#allocation11], 4
      %s101 = int_to_ptr.vmem [resolvable:$true] %s100
      %106 = dma.hbm_to_vmem [thread:$0]  %s99, 2048, %s101, [#allocation12], 128, 128, 8
    $region41: #{tpu_custom_call.1} parent=1 // pred_fallthru
      _
    // Predicated region
    $region42: #{tpu_custom_call.1} parent=1 // pred_check
      _
    $region43: #{tpu_custom_call.1} parent=1 // pred_check_branch
      %108 = sbr.rel (0) target = $region45
    $region44: #{tpu_custom_call.1} parent=1 // pred_region
      _
    $region45: #{tpu_custom_call.1} parent=1 // pred_fallthru
      _
    // Predicated region
    $region46: #{tpu_custom_call.1} parent=1 // pred_check
      _
    $region47: #{tpu_custom_call.1} parent=1 // pred_check_branch
      %110 = sbr.rel (0) target = $region49
    $region48: #{tpu_custom_call.1} parent=1 // pred_region
      %112 = vsyncadd [#allocation12], 0
      %s113 = sshll.u32 %s11, 4
      %s114 = int_to_ptr.hbm [resolvable:$true] %s113
      %s115 = sshll.u32 [#allocation13], 4
      %s116 = int_to_ptr.vmem [resolvable:$true] %s115
      %121 = dma.hbm_to_vmem [thread:$0]  %s114, 2048, %s116, [#allocation12], 128, 128, 8
    $region49: #{tpu_custom_call.1} parent=1 // pred_fallthru
      _
    // Predicated region
    $region50: #{tpu_custom_call.1} parent=1 // pred_check
      _
    $region51: #{tpu_custom_call.1} parent=1 // pred_check_branch
      %123 = sbr.rel (0) target = $region53
    $region52: #{tpu_custom_call.1} parent=1 // pred_region
      _
    $region53: #{tpu_custom_call.1} parent=1 // pred_fallthru
      _
    // Predicated region
    $region54: #{tpu_custom_call.1} parent=1 // pred_check
      _
    $region55: #{tpu_custom_call.1} parent=1 // pred_check_branch
      %125 = sbr.rel (0) target = $region57
    $region56: #{tpu_custom_call.1} parent=1 // pred_region
      %127 = dma.done [#allocation3], 128
    $region57: #{tpu_custom_call.1} parent=1 // pred_fallthru
      _
    // Predicated region
    $region58: #{tpu_custom_call.1} parent=1 // pred_check
      _
    $region59: #{tpu_custom_call.1} parent=1 // pred_check_branch
      %129 = sbr.rel (0) target = $region61
    $region60: #{tpu_custom_call.1} parent=1 // pred_region
      %131 = dma.done [#allocation6], 1024
    $region61: #{tpu_custom_call.1} parent=1 // pred_fallthru
      _
    // Predicated region
    $region62: #{tpu_custom_call.1} parent=1 // pred_check
      _
    $region63: #{tpu_custom_call.1} parent=1 // pred_check_branch
      %133 = sbr.rel (0) target = $region65
    $region64: #{tpu_custom_call.1} parent=1 // pred_region
      %135 = dma.done [#allocation6], 2048
    $region65: #{tpu_custom_call.1} parent=1 // pred_fallthru
      _
    // Predicated region
    $region66: #{tpu_custom_call.1} parent=1 // pred_check
      _
    $region67: #{tpu_custom_call.1} parent=1 // pred_check_branch
      %137 = sbr.rel (0) target = $region69
    $region68: #{tpu_custom_call.1} parent=1 // pred_region
      %139 = dma.done [#allocation9], 1024
    $region69: #{tpu_custom_call.1} parent=1 // pred_fallthru
      _
    // Predicated region
    $region70: #{tpu_custom_call.1} parent=1 // pred_check
      _
    $region71: #{tpu_custom_call.1} parent=1 // pred_check_branch
      %141 = sbr.rel (0) target = $region73
    $region72: #{tpu_custom_call.1} parent=1 // pred_region
      %143 = dma.done [#allocation9], 2048
    $region73: #{tpu_custom_call.1} parent=1 // pred_fallthru
      _
    // Predicated region
    $region74: #{tpu_custom_call.1} parent=1 // pred_check
      _
    $region75: #{tpu_custom_call.1} parent=1 // pred_check_branch
      %145 = sbr.rel (0) target = $region77
    $region76: #{tpu_custom_call.1} parent=1 // pred_region
      %147 = dma.done [#allocation12], 2048
    $region77: #{tpu_custom_call.1} parent=1 // pred_fallthru
      _
    // Predicated region
    $region78: #{tpu_custom_call.1} parent=1 // pred_check
      _
    $region79: #{tpu_custom_call.1} parent=1 // pred_check_branch
      %149 = sbr.rel (0) target = $region81
    $region80: #{tpu_custom_call.1} parent=1 // pred_region
      %151 = dma.done [#allocation12], 2048
    $region81: #{tpu_custom_call.1} parent=1 // pred_fallthru
      _
    %v152 = vld [vmem:[#allocation2] sm:$0xff]
    %v153 = vld [vmem:[#allocation5] sm:$0xff]
    %v154 = vld [vmem:[#allocation5 + $0x8] sm:$0xff]
    %v155 = vld [vmem:[#allocation5 + $0x10] sm:$0xff]
    %v156 = vld [vmem:[#allocation5 + $0x18] sm:$0xff]
    %v157 = vld [vmem:[#allocation5 + $0x20] sm:$0xff]
    %v158 = vld [vmem:[#allocation5 + $0x28] sm:$0xff]
    %v159 = vld [vmem:[#allocation5 + $0x30] sm:$0xff]
    %v160 = vld [vmem:[#allocation5 + $0x38] sm:$0xff]
    %v161 = vld [vmem:[%s2] sm:$0x1]
    %v163 = vperm.slane %v161, 0
    %vm165 = vcmask 523264
    %v167 = vsel %vm165, %v152, 0
    %169 = vmatpush.msra.mxu0 0.0
    %170 = vmatpush.msra.mxu0 0.0
    %171 = vmatpush.msra.mxu0 0.0
    %172 = vmatpush.msra.mxu0 0.0
    %173 = vmatpush.msra.mxu0 0.0
    %174 = vmatpush.msra.mxu0 0.0
    %175 = vmatpush.msra.mxu0 0.0
    %176 = vmatpush.msra.mxu0 0.0
    %177 = vmatpush.msra.mxu0 %v160
    %178 = vmatpush.msra.mxu0 %v159
    %179 = vmatpush.msra.mxu0 %v158
    %180 = vmatpush.msra.mxu0 %v157
    %181 = vmatpush.msra.mxu0 %v156
    %182 = vmatpush.msra.mxu0 %v155
    %183 = vmatpush.msra.mxu0 %v154
    %184 = vmatpush.msra.mxu0 %v153
    %185 = vmatmul.f32.gmra.mxu0 %v167
    %v186 = vpop.f32.mrf.mxu0
    %v187 = vadd.f32 %v163, %v186
    %188 = vdwg.mxu0
    %v189 = vtanh.pop %v187
    %v190 = vld [vmem:[#allocation7] sm:$0xff]
    %v191 = vld [vmem:[#allocation7 + $0x8] sm:$0xff]
    %v192 = vld [vmem:[#allocation7 + $0x10] sm:$0xff]
    %v193 = vld [vmem:[#allocation7 + $0x18] sm:$0xff]
    %v194 = vld [vmem:[#allocation7 + $0x20] sm:$0xff]
    %v195 = vld [vmem:[#allocation7 + $0x28] sm:$0xff]
    %v196 = vld [vmem:[#allocation7 + $0x30] sm:$0xff]
    %v197 = vld [vmem:[#allocation7 + $0x38] sm:$0xff]
    %v198 = vld [vmem:[#allocation7 + $0x40] sm:$0xff]
    %v199 = vld [vmem:[#allocation7 + $0x48] sm:$0xff]
    %v200 = vld [vmem:[#allocation7 + $0x50] sm:$0xff]
    %v201 = vld [vmem:[#allocation7 + $0x58] sm:$0xff]
    %v202 = vld [vmem:[#allocation7 + $0x60] sm:$0xff]
    %v203 = vld [vmem:[#allocation7 + $0x68] sm:$0xff]
    %v204 = vld [vmem:[#allocation7 + $0x70] sm:$0xff]
    %v205 = vld [vmem:[#allocation7 + $0x78] sm:$0xff]
    %v206 = vld [vmem:[%s4] sm:$0x1]
    %v208 = vperm.slane %v206, 0
    %210 = vmatpush.msra.mxu0 %v205
    %211 = vmatpush.msra.mxu0 %v204
    %212 = vmatpush.msra.mxu0 %v203
    %213 = vmatpush.msra.mxu0 %v202
    %214 = vmatpush.msra.mxu0 %v201
    %215 = vmatpush.msra.mxu0 %v200
    %216 = vmatpush.msra.mxu0 %v199
    %217 = vmatpush.msra.mxu0 %v198
    %218 = vmatpush.msra.mxu0 %v197
    %219 = vmatpush.msra.mxu0 %v196
    %220 = vmatpush.msra.mxu0 %v195
    %221 = vmatpush.msra.mxu0 %v194
    %222 = vmatpush.msra.mxu0 %v193
    %223 = vmatpush.msra.mxu0 %v192
    %224 = vmatpush.msra.mxu0 %v191
    %225 = vmatpush.msra.mxu0 %v190
    %226 = vmatmul.f32.gmra.mxu0 %v189
    %v227 = vpop.f32.mrf.mxu0
    %v228 = vadd.f32 %v208, %v227
    %229 = vdwg.mxu0
    %v230 = vtanh.pop %v228
    %v231 = vld [vmem:[#allocation8] sm:$0xff]
    %v232 = vld [vmem:[#allocation8 + $0x8] sm:$0xff]
    %v233 = vld [vmem:[#allocation8 + $0x10] sm:$0xff]
    %v234 = vld [vmem:[#allocation8 + $0x18] sm:$0xff]
    %v235 = vld [vmem:[#allocation8 + $0x20] sm:$0xff]
    %v236 = vld [vmem:[#allocation8 + $0x28] sm:$0xff]
    %v237 = vld [vmem:[#allocation8 + $0x30] sm:$0xff]
    %v238 = vld [vmem:[#allocation8 + $0x38] sm:$0xff]
    %v239 = vld [vmem:[%s6] sm:$0x1]
    %v241 = vperm.slane %v239, 0
    %243 = vmatpush.msra.mxu0 0.0
    %244 = vmatpush.msra.mxu0 0.0
    %245 = vmatpush.msra.mxu0 0.0
    %246 = vmatpush.msra.mxu0 0.0
    %247 = vmatpush.msra.mxu0 0.0
    %248 = vmatpush.msra.mxu0 0.0
    %249 = vmatpush.msra.mxu0 0.0
    %250 = vmatpush.msra.mxu0 0.0
    %251 = vmatpush.msra.mxu0 %v238
    %252 = vmatpush.msra.mxu0 %v237
    %253 = vmatpush.msra.mxu0 %v236
    %254 = vmatpush.msra.mxu0 %v235
    %255 = vmatpush.msra.mxu0 %v234
    %256 = vmatpush.msra.mxu0 %v233
    %257 = vmatpush.msra.mxu0 %v232
    %258 = vmatpush.msra.mxu0 %v231
    %259 = vmatmul.f32.gmra.mxu0 %v167
    %v260 = vpop.f32.mrf.mxu0
    %v261 = vadd.f32 %v241, %v260
    %262 = vdwg.mxu0
    %v263 = vadd.f32 %v230, %v261
    %v264 = vmax.f32 %v263, 0.0
    %v265 = vld [vmem:[#allocation10] sm:$0xff]
    %v266 = vld [vmem:[#allocation10 + $0x8] sm:$0xff]
    %v267 = vld [vmem:[#allocation10 + $0x10] sm:$0xff]
    %v268 = vld [vmem:[#allocation10 + $0x18] sm:$0xff]
    %v269 = vld [vmem:[#allocation10 + $0x20] sm:$0xff]
    %v270 = vld [vmem:[#allocation10 + $0x28] sm:$0xff]
    %v271 = vld [vmem:[#allocation10 + $0x30] sm:$0xff]
    %v272 = vld [vmem:[#allocation10 + $0x38] sm:$0xff]
    %v273 = vld [vmem:[#allocation10 + $0x40] sm:$0xff]
    %v274 = vld [vmem:[#allocation10 + $0x48] sm:$0xff]
    %v275 = vld [vmem:[#allocation10 + $0x50] sm:$0xff]
    %v276 = vld [vmem:[#allocation10 + $0x58] sm:$0xff]
    %v277 = vld [vmem:[#allocation10 + $0x60] sm:$0xff]
    %v278 = vld [vmem:[#allocation10 + $0x68] sm:$0xff]
    %v279 = vld [vmem:[#allocation10 + $0x70] sm:$0xff]
    %v280 = vld [vmem:[#allocation10 + $0x78] sm:$0xff]
    %v281 = vld [vmem:[%s8] sm:$0x1]
    %v283 = vperm.slane %v281, 0
    %285 = vmatpush.msra.mxu0 %v280
    %286 = vmatpush.msra.mxu0 %v279
    %287 = vmatpush.msra.mxu0 %v278
    %288 = vmatpush.msra.mxu0 %v277
    %289 = vmatpush.msra.mxu0 %v276
    %290 = vmatpush.msra.mxu0 %v275
    %291 = vmatpush.msra.mxu0 %v274
    %292 = vmatpush.msra.mxu0 %v273
    %293 = vmatpush.msra.mxu0 %v272
    %294 = vmatpush.msra.mxu0 %v271
    %295 = vmatpush.msra.mxu0 %v270
    %296 = vmatpush.msra.mxu0 %v269
    %297 = vmatpush.msra.mxu0 %v268
    %298 = vmatpush.msra.mxu0 %v267
    %299 = vmatpush.msra.mxu0 %v266
    %300 = vmatpush.msra.mxu0 %v265
    %301 = vmatmul.f32.gmra.mxu0 %v264
    %v302 = vpop.f32.mrf.mxu0
    %v303 = vadd.f32 %v283, %v302
    %304 = vdwg.mxu0
    %v305 = vtanh.pop %v303
    %v306 = vld [vmem:[#allocation11] sm:$0xff]
    %v307 = vld [vmem:[#allocation11 + $0x8] sm:$0xff]
    %v308 = vld [vmem:[#allocation11 + $0x10] sm:$0xff]
    %v309 = vld [vmem:[#allocation11 + $0x18] sm:$0xff]
    %v310 = vld [vmem:[#allocation11 + $0x20] sm:$0xff]
    %v311 = vld [vmem:[#allocation11 + $0x28] sm:$0xff]
    %v312 = vld [vmem:[#allocation11 + $0x30] sm:$0xff]
    %v313 = vld [vmem:[#allocation11 + $0x38] sm:$0xff]
    %v314 = vld [vmem:[#allocation11 + $0x40] sm:$0xff]
    %v315 = vld [vmem:[#allocation11 + $0x48] sm:$0xff]
    %v316 = vld [vmem:[#allocation11 + $0x50] sm:$0xff]
    %v317 = vld [vmem:[#allocation11 + $0x58] sm:$0xff]
    %v318 = vld [vmem:[#allocation11 + $0x60] sm:$0xff]
    %v319 = vld [vmem:[#allocation11 + $0x68] sm:$0xff]
    %v320 = vld [vmem:[#allocation11 + $0x70] sm:$0xff]
    %v321 = vld [vmem:[#allocation11 + $0x78] sm:$0xff]
    %v322 = vld [vmem:[%s10] sm:$0x1]
    %v324 = vperm.slane %v322, 0
    %326 = vmatpush.msra.mxu0 %v321
    %327 = vmatpush.msra.mxu0 %v320
    %328 = vmatpush.msra.mxu0 %v319
    %329 = vmatpush.msra.mxu0 %v318
    %330 = vmatpush.msra.mxu0 %v317
    %331 = vmatpush.msra.mxu0 %v316
    %332 = vmatpush.msra.mxu0 %v315
    %333 = vmatpush.msra.mxu0 %v314
    %334 = vmatpush.msra.mxu0 %v313
    %335 = vmatpush.msra.mxu0 %v312
    %336 = vmatpush.msra.mxu0 %v311
    %337 = vmatpush.msra.mxu0 %v310
    %338 = vmatpush.msra.mxu0 %v309
    %339 = vmatpush.msra.mxu0 %v308
    %340 = vmatpush.msra.mxu0 %v307
    %341 = vmatpush.msra.mxu0 %v306
    %342 = vmatmul.f32.gmra.mxu0 %v305
    %v343 = vpop.f32.mrf.mxu0
    %v344 = vadd.f32 %v324, %v343
    %345 = vdwg.mxu0
    %v346 = vtanh.pop %v344
    %v347 = vld [vmem:[#allocation13] sm:$0xff]
    %v348 = vld [vmem:[#allocation13 + $0x8] sm:$0xff]
    %v349 = vld [vmem:[#allocation13 + $0x10] sm:$0xff]
    %v350 = vld [vmem:[#allocation13 + $0x18] sm:$0xff]
    %v351 = vld [vmem:[#allocation13 + $0x20] sm:$0xff]
    %v352 = vld [vmem:[#allocation13 + $0x28] sm:$0xff]
    %v353 = vld [vmem:[#allocation13 + $0x30] sm:$0xff]
    %v354 = vld [vmem:[#allocation13 + $0x38] sm:$0xff]
    %v355 = vld [vmem:[#allocation13 + $0x40] sm:$0xff]
    %v356 = vld [vmem:[#allocation13 + $0x48] sm:$0xff]
    %v357 = vld [vmem:[#allocation13 + $0x50] sm:$0xff]
    %v358 = vld [vmem:[#allocation13 + $0x58] sm:$0xff]
    %v359 = vld [vmem:[#allocation13 + $0x60] sm:$0xff]
    %v360 = vld [vmem:[#allocation13 + $0x68] sm:$0xff]
    %v361 = vld [vmem:[#allocation13 + $0x70] sm:$0xff]
    %v362 = vld [vmem:[#allocation13 + $0x78] sm:$0xff]
    %v363 = vld [vmem:[%s12] sm:$0x1]
    %v365 = vperm.slane %v363, 0
    %367 = vmatpush.msra.mxu0 %v362
    %368 = vmatpush.msra.mxu0 %v361
    %369 = vmatpush.msra.mxu0 %v360
    %370 = vmatpush.msra.mxu0 %v359
    %371 = vmatpush.msra.mxu0 %v358
    %372 = vmatpush.msra.mxu0 %v357
    %373 = vmatpush.msra.mxu0 %v356
    %374 = vmatpush.msra.mxu0 %v355
    %375 = vmatpush.msra.mxu0 %v354
    %376 = vmatpush.msra.mxu0 %v353
    %377 = vmatpush.msra.mxu0 %v352
    %378 = vmatpush.msra.mxu0 %v351
    %379 = vmatpush.msra.mxu0 %v350
    %380 = vmatpush.msra.mxu0 %v349
    %381 = vmatpush.msra.mxu0 %v348
    %382 = vmatpush.msra.mxu0 %v347
    %383 = vmatmul.f32.gmra.mxu0 %v264
    %v384 = vpop.f32.mrf.mxu0
    %v385 = vadd.f32 %v365, %v384
    %386 = vdwg.mxu0
    %v387 = vadd.f32 %v346, %v385
    %v388 = vmax.f32 %v387, 0.0
    %389 = vst [vmem:[#allocation14] sm:$0xff] %v388
    // Predicated region
    $region82: #{tpu_custom_call.1} parent=1 // pred_check
      _
    $region83: #{tpu_custom_call.1} parent=1 // pred_check_branch
      %391 = sbr.rel (0) target = $region85
    $region84: #{tpu_custom_call.1} parent=1 // pred_region
      %393 = vsyncadd [#allocation4], 0
      %s395 = sshll.u32 [#allocation14], 4
      %s396 = int_to_ptr.vmem [resolvable:$true] %s395
      %s397 = sshll.u32 %s13, 4
      %s398 = int_to_ptr.hbm [resolvable:$true] %s397
      %400 = dma.vmem_to_hbm [thread:$0]  %s396, 128, %s398, [#allocation4]
    $region85: #{tpu_custom_call.1} parent=1 // pred_fallthru
      _
    // Predicated region
    $region86: #{tpu_custom_call.1} parent=1 // pred_check
      _
    $region87: #{tpu_custom_call.1} parent=1 // pred_check_branch
      %402 = sbr.rel (0) target = $region89
    $region88: #{tpu_custom_call.1} parent=1 // pred_region
      %404 = dma.done [#allocation4], 128
    $region89: #{tpu_custom_call.1} parent=1 // pred_fallthru
      _
    %405 = vsyncpa [#allocation3], 1
    %406 = vsyncpa [#allocation6], 1
    %407 = vsyncpa [#allocation9], 1
    %408 = vsyncpa [#allocation12], 1
    %409 = vsyncpa [#allocation4], 1

</llo_original>
